<compile_context>
chip_gen: v5e
topology: v5e:2x2
jax: 0.10.0
libtpu: 0.0.40
codegen_flags: <defaults>
</compile_context>

<pallas_src>
import jax
import jax.numpy as jnp
from jax.experimental import pallas as pl
from jax.experimental.pallas import tpu as pltpu


def baseline_kernel(x_ref, tw_ref, b_ref, out_ref):
    # x_ref:   (S, B) int32   token ids (VMEM)
    # tw_ref:  (1, V) float32 precomputed table @ w, lane-dense row (VMEM)
    # b_ref:   (1, 1) float32 fc bias (SMEM scalar)
    # out_ref: (B, 1) float32 sigmoid(logits)
    S, B = x_ref.shape
    V = tw_ref.shape[1]

    # Token counts per (batch, vocab) — V on the 128-lane axis.
    x = x_ref[...]                                                  # (S, B)
    vocab_iota = jax.lax.broadcasted_iota(jnp.int32, (1, 1, V), 2)  # (1, 1, V)
    onehot = (x[:, :, None] == vocab_iota).astype(jnp.float32)      # (S, B, V)
    counts = jnp.sum(onehot, axis=0)                                # (B, V)  VALU adds

    # logits[b] = (1/S) * sum_v counts[b, v] * tw[v] + bias
    weighted = counts * tw_ref[...]                                 # (B, V) broadcast (1,V)
    logits = jnp.sum(weighted, axis=1, keepdims=True)               # (B, 1) lane (XLU) reduce
    logits = logits * (1.0 / S) + b_ref[0, 0]

    out_ref[...] = jax.nn.sigmoid(logits)


def baseline_forward(x, table, w, b):
    """x: (S, B) int32; table: (V, D); w: (D, 1); b: (1, 1) -> (B,) float32."""
    S, B = x.shape
    V = table.shape[0]

    # Weight-only precompute (hoisted out of the kernel): tw[v] = table[v, :] @ w.
    # XLA computes this once per weight set; the (V, D) table never hits VMEM.
    tw = jnp.dot(table, w, preferred_element_type=jnp.float32).reshape(1, V)

    out = pl.pallas_call(
        baseline_kernel,
        out_shape=jax.ShapeDtypeStruct((B, 1), jnp.float32),
        in_specs=[
            pl.BlockSpec(memory_space=pltpu.MemorySpace.VMEM),   # x
            pl.BlockSpec(memory_space=pltpu.MemorySpace.VMEM),   # tw (1, V)
            pl.BlockSpec(memory_space=pltpu.MemorySpace.SMEM),   # b (scalar)
        ],
        out_specs=pl.BlockSpec(memory_space=pltpu.MemorySpace.VMEM),
    )(x, tw, b)
    return out[:, 0]  # (B,)


def baseline_reference(x, table, w, b):
    """Pure-JAX reference matching the PyTorch forward exactly."""
    embedded = jnp.take(table, x, axis=0)           # (S, B, D)
    average = embedded.mean(axis=0)                 # (B, D)
    logits = average @ w + b                        # (B, 1)
    return jax.nn.sigmoid(logits)[:, 0]             # (B,)


if __name__ == "__main__":
    SEQ, BATCH, VOCAB, EMBED = 8, 8, 128, 128

    key = jax.random.PRNGKey(0)
    k_tab, k_w, k_b, k_x = jax.random.split(key, 4)

    # Deterministic "pretrained" embedding vectors and fc parameters.
    table = jax.random.normal(k_tab, (VOCAB, EMBED), dtype=jnp.float32)
    w = (jax.random.normal(k_w, (EMBED, 1), dtype=jnp.float32)
         * (1.0 / jnp.sqrt(EMBED)))
    b = jax.random.normal(k_b, (1, 1), dtype=jnp.float32) * 0.01

    # Token ids, seq-first layout (S, B), all within [0, VOCAB).
    x = jax.random.randint(k_x, (SEQ, BATCH), 0, VOCAB, dtype=jnp.int32)

    out = baseline_forward(x, table, w, b)
    out = jax.block_until_ready(out)

    ref = baseline_reference(x, table, w, b)
    assert out.shape == (BATCH,)
    assert jnp.allclose(out, ref, atol=1e-5, rtol=1e-5), (out, ref)

    print("KERNEL_OK")
</pallas_src>

<mosaic_0001>
module attributes {stable_mosaic.version = 11 : i64} {
  func.func @baseline_kernel(%arg0: memref<8x8xi32, #tpu.memory_space<vmem>>, %arg1: memref<1x128xf32, #tpu.memory_space<vmem>>, %arg2: memref<1x1xf32, #tpu.memory_space<smem>>, %arg3: memref<8x1xf32, #tpu.memory_space<vmem>>) attributes {dimension_semantics = [], scalar_prefetch = 0 : i64, scratch_operands = 0 : i64, tpu.core_type = #tpu.core_type<tc>} {
    %c0 = arith.constant 0 : index
    %c0_0 = arith.constant 0 : index
    %0 = vector.load %arg0[%c0, %c0_0] : memref<8x8xi32, #tpu.memory_space<vmem>>, vector<8x8xi32>
    %1 = tpu.iota {dimensions = array<i32: 2>} : vector<1x1x128xi32>
    %2 = vector.shape_cast %0 : vector<8x8xi32> to vector<8x8x1xi32>
    %3 = vector.broadcast %2 : vector<8x8x1xi32> to vector<8x8x128xi32>
    %4 = vector.broadcast %1 : vector<1x1x128xi32> to vector<8x8x128xi32>
    %5 = arith.cmpi eq, %3, %4 : vector<8x8x128xi32>
    %6 = arith.extui %5 : vector<8x8x128xi1> to vector<8x8x128xi32>
    %7 = arith.sitofp %6 : vector<8x8x128xi32> to vector<8x8x128xf32>
    %cst = arith.constant dense<0.000000e+00> : vector<8x128xf32>
    %8 = vector.multi_reduction <add>, %7, %cst [0] : vector<8x8x128xf32> to vector<8x128xf32>
    %c0_1 = arith.constant 0 : index
    %c0_2 = arith.constant 0 : index
    %9 = vector.load %arg1[%c0_1, %c0_2] : memref<1x128xf32, #tpu.memory_space<vmem>>, vector<1x128xf32>
    %10 = vector.broadcast %9 : vector<1x128xf32> to vector<8x128xf32>
    %11 = arith.mulf %8, %10 : vector<8x128xf32>
    %cst_3 = arith.constant dense<0.000000e+00> : vector<8xf32>
    %12 = vector.multi_reduction <add>, %11, %cst_3 [1] : vector<8x128xf32> to vector<8xf32>
    %13 = vector.shape_cast %12 : vector<8xf32> to vector<8x1xf32>
    %cst_4 = arith.constant 1.250000e-01 : f32
    %14 = vector.broadcast %cst_4 : f32 to vector<8x1xf32>
    %15 = arith.mulf %13, %14 : vector<8x1xf32>
    %c0_5 = arith.constant 0 : index
    %c0_6 = arith.constant 0 : index
    %16 = memref.load %arg2[%c0_5, %c0_6] : memref<1x1xf32, #tpu.memory_space<smem>>
    %17 = vector.broadcast %16 : f32 to vector<8x1xf32>
    %18 = arith.addf %15, %17 : vector<8x1xf32>
    %19 = arith.negf %18 : vector<8x1xf32>
    %20 = math.exp %19 : vector<8x1xf32>
    %cst_7 = arith.constant 1.000000e+00 : f32
    %21 = vector.broadcast %cst_7 : f32 to vector<8x1xf32>
    %22 = arith.addf %21, %20 : vector<8x1xf32>
    %23 = arith.divf %21, %22 : vector<8x1xf32>
    %c0_8 = arith.constant 0 : index
    %c0_9 = arith.constant 0 : index
    %24 = vector.load %arg3[%c0_8, %c0_9] : memref<8x1xf32, #tpu.memory_space<vmem>>, vector<8x1xf32>
    tpu.vector_store %arg3[%c0_8, %c0_9], %23 {strides = array<i32>} : memref<8x1xf32, #tpu.memory_space<vmem>>, vector<8x1xf32>,
    return
  }
}

</mosaic_0001>

<llo_original>
// kernel: tpu_custom_call.1
$region0: #{tpu_custom_call.1}
  #allocation0 [shape = 'u32[]', space=smem, size = 0x4, offset = 0x4, fixed_abs, tag = 'smem constant byte address 0x4 - core index']
  #allocation1 [shape = 'u32[72,128]{1,0:T(1,128)}', space=vmem, size = 0x9000, scoped, tag = 'internal scratch']
  #allocation2 [shape = 'f32[1,1]{1,0:T(1,128)S(6)}', space=smem, size = 0x200, scoped, tag = 'scoped memory for tpu_custom_call.1']
  %s0 = inlined_call_operand.hbm [shape: s32[8,8], index: 0, kind: input, shape index: {}]
  %s1 = inlined_call_operand.vmem [shape: f32[1,128], index: 1, kind: input, shape index: {}]
  %s2 = inlined_call_operand.<no memory space> [shape: f32[1,1], index: 2, kind: input, shape index: {}]
  %s3 = inlined_call_operand.vmem [shape: f32[8,1], index: 3, kind: output, shape index: {}]
  %s4 = sld [smem:[#allocation0]]
  $region26: #{tpu_custom_call.1} parent=0
    _
  %s6 = ssub.s32 1, %s4
  %s7 = scalar_select 0, %s6, %s4
  %8 = sst [smem:[#allocation2]] %s2
  $region1: #{tpu_custom_call.1} parent=0
    #allocation3 [shape = 'u8[4096]{0}', space=vmem, size = 0x1000, scoped, tag = 'input window, operand 0, single buffered']
    #allocation4 [shape = 's32[1]{0}', space=sflag, size = 0x4, scoped, tag = 'scoped memory for tpu_custom_call.1']
    %9 = vsyncpa [#allocation4], 0
    // Predicated region
    $region2: #{tpu_custom_call.1} parent=1 // pred_check
      _
    $region3: #{tpu_custom_call.1} parent=1 // pred_check_branch
      %11 = sbr.rel (0) target = $region5
    $region4: #{tpu_custom_call.1} parent=1 // pred_region
      %13 = vsyncadd [#allocation4], 0
      %s15 = sshll.u32 %s0, 4
      %s16 = int_to_ptr.hbm [resolvable:$true] %s15
      %s17 = sshll.u32 [#allocation3], 4
      %s18 = int_to_ptr.vmem [resolvable:$true] %s17
      %20 = dma.hbm_to_vmem [thread:$0]  %s16, 128, %s18, [#allocation4]
    $region5: #{tpu_custom_call.1} parent=1 // pred_fallthru
      _
    // Predicated region
    $region6: #{tpu_custom_call.1} parent=1 // pred_check
      _
    $region7: #{tpu_custom_call.1} parent=1 // pred_check_branch
      %22 = sbr.rel (0) target = $region9
    $region8: #{tpu_custom_call.1} parent=1 // pred_region
      _
    $region9: #{tpu_custom_call.1} parent=1 // pred_fallthru
      _
    // Predicated region
    $region10: #{tpu_custom_call.1} parent=1 // pred_check
      _
    $region11: #{tpu_custom_call.1} parent=1 // pred_check_branch
      %24 = sbr.rel (0) target = $region13
    $region12: #{tpu_custom_call.1} parent=1 // pred_region
      _
    $region13: #{tpu_custom_call.1} parent=1 // pred_fallthru
      _
    // Predicated region
    $region14: #{tpu_custom_call.1} parent=1 // pred_check
      _
    $region15: #{tpu_custom_call.1} parent=1 // pred_check_branch
      %26 = sbr.rel (0) target = $region17
    $region16: #{tpu_custom_call.1} parent=1 // pred_region
      %28 = dma.done [#allocation4], 128
    $region17: #{tpu_custom_call.1} parent=1 // pred_fallthru
      _
    %v29 = vld [vmem:[#allocation3] sm:$0xff]
    %v30 = vlaneseq
    %v31 = vand.u32 %v30, 127
    %v32 = vperm.slane %v29, 0
    %v33 = vlaneseq
    %v34 = vshrl.u32 %v33, 7
    %36 = vset.pattern.permute.xlu0 %v34
    %37 = vperm.xlu0 %36, %v32
    %v38 = vpop.permute.xlu0 %37
    %v39 = vperm.slane %v29, 1
    %v40 = vlaneseq
    %v41 = vshrl.u32 %v40, 7
    %43 = vset.pattern.permute.xlu0 %v41
    %44 = vperm.xlu0 %43, %v39
    %v45 = vpop.permute.xlu0 %44
    %v46 = vperm.slane %v29, 2
    %v47 = vlaneseq
    %v48 = vshrl.u32 %v47, 7
    %50 = vset.pattern.permute.xlu0 %v48
    %51 = vperm.xlu0 %50, %v46
    %v52 = vpop.permute.xlu0 %51
    %v53 = vperm.slane %v29, 3
    %v54 = vlaneseq
    %v55 = vshrl.u32 %v54, 7
    %57 = vset.pattern.permute.xlu0 %v55
    %58 = vperm.xlu0 %57, %v53
    %v59 = vpop.permute.xlu0 %58
    %v60 = vperm.slane %v29, 4
    %v61 = vlaneseq
    %v62 = vshrl.u32 %v61, 7
    %64 = vset.pattern.permute.xlu0 %v62
    %65 = vperm.xlu0 %64, %v60
    %v66 = vpop.permute.xlu0 %65
    %v67 = vperm.slane %v29, 5
    %v68 = vlaneseq
    %v69 = vshrl.u32 %v68, 7
    %71 = vset.pattern.permute.xlu0 %v69
    %72 = vperm.xlu0 %71, %v67
    %v73 = vpop.permute.xlu0 %72
    %v74 = vperm.slane %v29, 6
    %v75 = vlaneseq
    %v76 = vshrl.u32 %v75, 7
    %78 = vset.pattern.permute.xlu0 %v76
    %79 = vperm.xlu0 %78, %v74
    %v80 = vpop.permute.xlu0 %79
    %v81 = vperm.slane %v29, 7
    %v82 = vlaneseq
    %v83 = vshrl.u32 %v82, 7
    %85 = vset.pattern.permute.xlu0 %v83
    %86 = vperm.xlu0 %85, %v81
    %v87 = vpop.permute.xlu0 %86
    %vm88 = vcmp.eq.s32.totalorder %v38, %v31
    %vm89 = vcmp.eq.s32.totalorder %v45, %v31
    %vm90 = vcmp.eq.s32.totalorder %v52, %v31
    %vm91 = vcmp.eq.s32.totalorder %v59, %v31
    %vm92 = vcmp.eq.s32.totalorder %v66, %v31
    %vm93 = vcmp.eq.s32.totalorder %v73, %v31
    %vm94 = vcmp.eq.s32.totalorder %v80, %v31
    %vm95 = vcmp.eq.s32.totalorder %v87, %v31
    %v96 = vsel %vm88, 1, 0
    %v97 = vsel %vm89, 1, 0
    %v98 = vsel %vm90, 1, 0
    %v99 = vsel %vm91, 1, 0
    %v100 = vsel %vm92, 1, 0
    %v101 = vsel %vm93, 1, 0
    %v102 = vsel %vm94, 1, 0
    %v103 = vsel %vm95, 1, 0
    %v104 = vcvt.s32.f32 %v96
    %v105 = vcvt.s32.f32 %v97
    %v106 = vcvt.s32.f32 %v98
    %v107 = vcvt.s32.f32 %v99
    %v108 = vcvt.s32.f32 %v100
    %v109 = vcvt.s32.f32 %v101
    %v110 = vcvt.s32.f32 %v102
    %v111 = vcvt.s32.f32 %v103
    %v112 = vadd.f32 %v104, %v105
    %v113 = vadd.f32 %v112, %v106
    %v114 = vadd.f32 %v113, %v107
    %v115 = vadd.f32 %v114, %v108
    %v116 = vadd.f32 %v115, %v109
    %v117 = vadd.f32 %v116, %v110
    %v118 = vadd.f32 %v117, %v111
    %v119 = vld [vmem:[%s1] sm:$0x1]
    %v121 = vperm.slane %v119, 0
    %v123 = vmul.f32 %v118, %v121
    %124 = vadd.xlane.f32.xlu0 %v123
    %v125 = vpop.xlane.xlu0 %124
    %v126 = vmul.f32 %v125, 0.125
    %s127 = sld [smem:[#allocation2]]
    %v128 = vstv %s127
    %v129 = vadd.f32 %v126, %v128
    %v130 = vxor.u32 %v129, 2147483648
    %v131 = vmul.f32 %v130, 1.442695
    %v132 = vpow.pop %v131
    %v133 = vadd.f32 %v132, 1.0
    %v134 = vrcp.pop %v133
    %v135 = vmul.f32 %v133, %v134
    %v136 = vsub.f32 1.0, %v135
    %v137 = vmul.f32 %v134, %v136
    %v138 = vadd.f32 %v134, %v137
    %vm139 = vweird.f32 %v133
    %vm140 = vweird.f32 %v134
    %vm141 = vmor %vm139, %vm140
    %v142 = vsel %vm141, %v134, %v138
    %v143 = vand.u32 2147483647, %v133
    %vm144 = vcmp.eq.f32.partialorder %v143, 8.507059e+37
    %v145 = vand.u32 %v133, 2147483648
    %v146 = vor.u32 1.1754944e-38, %v145
    %v147 = vsel %vm144, %v146, %v142
    %v148 = vmul.f32 1.0, %v147
    %vm149 = vcmask 7168
    %150 = vst.msk [vmem:[%s3] sm:$0xff] %vm149, %v148
    // Predicated region
    $region18: #{tpu_custom_call.1} parent=1 // pred_check
      _
    $region19: #{tpu_custom_call.1} parent=1 // pred_check_branch
      %152 = sbr.rel (0) target = $region21
    $region20: #{tpu_custom_call.1} parent=1 // pred_region
      _
    $region21: #{tpu_custom_call.1} parent=1 // pred_fallthru
      _
    // Predicated region
    $region22: #{tpu_custom_call.1} parent=1 // pred_check
      _
    $region23: #{tpu_custom_call.1} parent=1 // pred_check_branch
      %154 = sbr.rel (0) target = $region25
    $region24: #{tpu_custom_call.1} parent=1 // pred_region
      _
    $region25: #{tpu_custom_call.1} parent=1 // pred_fallthru
      _
    %155 = vsyncpa [#allocation4], 1

</llo_original>
